<compile_context>
chip_gen: v7x
topology: tpu7x:2x2x1
jax: 0.10.0
libtpu: 0.0.40
codegen_flags: <defaults>
</compile_context>

<pallas_src>
import functools

import jax
import jax.numpy as jnp
from jax.experimental import pallas as pl
from jax.experimental.pallas import tpu as pltpu


def _round_up(x, m):
    return ((x + m - 1) // m) * m


def _choose_tiles(n, v, out_itemsize):
    """Pick (n_tile, tile_v): big, aligned, VMEM-safe, and megacore-friendly."""
    sub = 8 if out_itemsize >= 4 else 16          # bf16 packs 16 sublanes per vreg
    n_tile = min(256, _round_up(max(n, 1), sub))
    tile_v = min(2048, _round_up(max(v, 1), 128))

    # Keep the double-buffered output block comfortably under v7x's scoped VMEM.
    max_block_bytes = 8 << 20
    while n_tile * 3 * tile_v * out_itemsize > max_block_bytes and tile_v > 128:
        tile_v = max(128, _round_up(tile_v // 2, 128))
    while n_tile * 3 * tile_v * out_itemsize > max_block_bytes and n_tile > sub:
        n_tile = max(sub, _round_up(n_tile // 2, sub))

    # Megacore: ensure >= 2 grid steps along a "parallel" axis whenever possible,
    # so both v7x TensorCores write HBM.
    n_tiles = pl.cdiv(n, n_tile)
    v_tiles = pl.cdiv(v, tile_v)
    if n_tiles * v_tiles < 2:
        if v > 128:
            tile_v = _round_up(-(-v // 2), 128)
        elif n > sub:
            n_tile = _round_up(-(-n // 2), sub)
    return n_tile, tile_v


def _offset_kernel(skel_ref, coords_ref, out_ref, *, lim, n_tile, resident_skel):
    # skel_ref:   (N_pad, 3) VMEM-resident full skeleton  (or (n_tile, 3) block)
    # coords_ref: (1, 3*tile_v)   channel-interleaved normalized voxel coords
    # out_ref:    (n_tile, 3*tile_v) channel-interleaved clamped offsets
    L = out_ref.shape[1]

    if resident_skel:
        start = pl.multiple_of(pl.program_id(1) * n_tile, n_tile)
        skel = skel_ref[pl.ds(start, n_tile), :]          # (n_tile, 3)
    else:
        skel = skel_ref[...]                              # (n_tile, 3)

    # Channel pattern c = lane % 3, computed on a single (1, L) row (its cost is
    # amortized over the n_tile sublanes).  f32 floor-div trick is exact for
    # L < 2^22 (asserted in the wrapper); avoids vector int div/mod lowering.
    lane = jax.lax.broadcasted_iota(jnp.int32, (1, L), 1).astype(jnp.float32)
    c = lane - 3.0 * jnp.floor(lane * (1.0 / 3.0))        # (1, L) in {0., 1., 2.}

    s0 = skel[:, 0:1]                                     # (n_tile, 1)
    s1 = skel[:, 1:2]
    s2 = skel[:, 2:3]
    skel_sel = jnp.where(c < 0.5, s0, jnp.where(c < 1.5, s1, s2))   # (n_tile, L)

    off = jnp.clip(skel_sel - coords_ref[...], -lim, lim)
    out_ref[...] = off.astype(out_ref.dtype)


def heatmap_offset_generator(input_skeleton, heatmap_resolution, volume_center=None,
                             *, n_tile=None, tile_v=None, out_dtype=jnp.float32):
    """JAX/Pallas equivalent of HeatmapOffsetGenerator.forward."""
    b, num_joints, dims = input_skeleton.shape
    assert dims == 3
    r = int(heatmap_resolution)
    v = r * r * r
    n = b * num_joints

    skel = input_skeleton
    if volume_center is not None:
        skel = input_skeleton - volume_center              # same broadcasting as torch
    skel_flat = skel.reshape(n, 3).astype(jnp.float32)

    itemsize = jnp.dtype(out_dtype).itemsize
    auto_nt, auto_tv = _choose_tiles(n, v, itemsize)
    if n_tile is None:
        n_tile = auto_nt
    if tile_v is None:
        tile_v = auto_tv
    sub = 8 if itemsize >= 4 else 16
    assert n_tile % sub == 0 and tile_v % 128 == 0
    assert 3 * tile_v < (1 << 22)      # exactness bound of the f32 lane%3 trick

    n_tiles = pl.cdiv(n, n_tile)
    v_tiles = pl.cdiv(v, tile_v)
    n_pad = n_tiles * n_tile           # pad the tiny skel so in-kernel slices are in-bounds
    v_pad = v_tiles * tile_v           # pad the tiny coords so its DMA stays in-bounds

    if n_pad != n:
        skel_flat = jnp.pad(skel_flat, ((0, n_pad - n), (0, 0)))

    # Channel-interleaved normalized voxel coords: coords[3*k + c] = coord_c(k)/(R/2) - 1,
    # k = row-major (x, y, z) linear index — matches torch.nonzero ordering.
    idx = jnp.indices((r, r, r), dtype=jnp.float32)        # (3, R, R, R)
    coords = jnp.moveaxis(idx, 0, -1).reshape(3 * v)       # (3V,), interleaved, c fastest
    coords = coords / (r / 2.0) - 1.0
    if v_pad != v:
        coords = jnp.pad(coords, (0, 3 * (v_pad - v)))
    coords = coords.reshape(1, 3 * v_pad)

    lim = 1.0 / (r / 2.0)

    # Keep the whole skeleton resident in VMEM (single DMA) unless B*J is huge.
    resident_skel = n_pad <= 4096      # (N,3) f32 lane-pads to ~512 B/row in VMEM
    if resident_skel:
        skel_spec = pl.BlockSpec((n_pad, 3), lambda vi, ni: (0, 0))
    else:
        skel_spec = pl.BlockSpec((n_tile, 3), lambda vi, ni: (ni, 0))

    cost = pl.CostEstimate(
        flops=5 * n * 3 * v,
        transcendentals=0,
        bytes_accessed=n * 3 * v * itemsize + coords.size * 4 + skel_flat.size * 4,
    )

    # Grid: V outer / N inner.  coords block index is constant across the inner N loop
    # (DMA'd once per V-tile); the resident skeleton is DMA'd once total.  Boundary
    # tiles (N % n_tile, V % tile_v) are handled by Pallas' masked partial stores —
    # the output array itself is exact-shape, so no wrapper-side slice pass.
    out_flat = pl.pallas_call(
        functools.partial(_offset_kernel, lim=lim, n_tile=n_tile,
                          resident_skel=resident_skel),
        out_shape=jax.ShapeDtypeStruct((n, 3 * v), out_dtype),
        grid_spec=pltpu.PrefetchScalarGridSpec(
            num_scalar_prefetch=0,
            grid=(v_tiles, n_tiles),
            in_specs=[
                skel_spec,                                              # skeleton
                pl.BlockSpec((1, 3 * tile_v), lambda vi, ni: (0, vi)),  # coords
            ],
            out_specs=pl.BlockSpec((n_tile, 3 * tile_v), lambda vi, ni: (ni, vi)),
        ),
        compiler_params=pltpu.CompilerParams(
            dimension_semantics=("parallel", "parallel"),
            vmem_limit_bytes=32 * 1024 * 1024,
        ),
        cost_estimate=cost,
    )(skel_flat, coords)

    # Pure metadata reshape: row layout is already [x, y, z, c] with c fastest.
    return out_flat.reshape(b, num_joints, r, r, r, 3)


def _reference(input_skeleton, heatmap_resolution, volume_center=None):
    """Pure-JAX reference mirroring the PyTorch loop semantics."""
    r = heatmap_resolution
    skel = input_skeleton if volume_center is None else input_skeleton - volume_center
    idx = jnp.indices((r, r, r), dtype=jnp.float32)            # (3, R, R, R)
    coords = jnp.moveaxis(idx / (r / 2.0) - 1.0, 0, -1)        # (R, R, R, 3)
    out = skel[:, :, None, None, None, :] - coords[None, None]
    lim = 1.0 / (r / 2.0)
    return jnp.clip(out, -lim, lim).astype(jnp.float32)


if __name__ == "__main__":
    key = jax.random.PRNGKey(0)
    b, num_joints, r = 2, 4, 16
    k1, k2, k3 = jax.random.split(key, 3)
    input_skeleton = jax.random.uniform(k1, (b, num_joints, 3),
                                        minval=-1.0, maxval=1.0, dtype=jnp.float32)
    volume_center = jax.random.uniform(k2, (b, 1, 3),
                                       minval=-0.2, maxval=0.2, dtype=jnp.float32)

    # No volume_center
    out1 = jax.block_until_ready(heatmap_offset_generator(input_skeleton, r))
    ref1 = _reference(input_skeleton, r)
    assert out1.shape == (b, num_joints, r, r, r, 3)
    assert jnp.allclose(out1, ref1, atol=1e-6)

    # With volume_center
    out2 = jax.block_until_ready(
        heatmap_offset_generator(input_skeleton, r, volume_center=volume_center))
    ref2 = _reference(input_skeleton, r, volume_center=volume_center)
    assert jnp.allclose(out2, ref2, atol=1e-6)

    # Odd shapes: exercises the masked boundary-tile path (R=12, B*J=3), no padding slice.
    skel_odd = jax.random.uniform(k3, (1, 3, 3), minval=-1.0, maxval=1.0,
                                  dtype=jnp.float32)
    out3 = jax.block_until_ready(heatmap_offset_generator(skel_odd, 12))
    ref3 = _reference(skel_odd, 12)
    assert out3.shape == (1, 3, 12, 12, 12, 3)
    assert jnp.allclose(out3, ref3, atol=1e-6)

    print("KERNEL_OK")
</pallas_src>

<mosaic_0001>
module attributes {stable_mosaic.version = 11 : i64} {
  func.func @_offset_kernel(%arg0: i32, %arg1: i32, %arg2: memref<8x3xf32, #tpu.memory_space<vmem>>, %arg3: memref<1x6144xf32, #tpu.memory_space<vmem>>, %arg4: memref<8x6144xf32, #tpu.memory_space<vmem>>) attributes {dimension_semantics = [#tpu.dimension_semantics<parallel>, #tpu.dimension_semantics<parallel>], iteration_bounds = array<i64: 2, 1>, scalar_prefetch = 0 : i64, scratch_operands = 0 : i64, tpu.core_type = #tpu.core_type<tc>, window_params = [{pipeline_mode = #tpu.pipeline_mode<synchronous>, transform_indices = @transform_0, window_bounds = array<i64: 8, 3>}, {transform_indices = @transform_1, window_bounds = array<i64: 1, 6144>}, {transform_indices = @transform_2, window_bounds = array<i64: 8, 6144>}]} {
    %c8_i32 = arith.constant 8 : i32
    %0 = arith.muli %arg1, %c8_i32 : i32
    %1 = tpu.assume_multiple %0, 8 : i32
    %2 = arith.index_cast %1 : i32 to index
    %c0 = arith.constant 0 : index
    %3 = vector.load %arg2[%2, %c0] : memref<8x3xf32, #tpu.memory_space<vmem>>, vector<8x3xf32>
    %4 = tpu.iota {dimensions = array<i32: 1>} : vector<1x6144xi32>
    %5 = arith.sitofp %4 : vector<1x6144xi32> to vector<1x6144xf32>
    %cst = arith.constant 0.333333343 : f32
    %6 = vector.broadcast %cst : f32 to vector<1x6144xf32>
    %7 = arith.mulf %5, %6 : vector<1x6144xf32>
    %8 = math.floor %7 : vector<1x6144xf32>
    %cst_0 = arith.constant 3.000000e+00 : f32
    %9 = vector.broadcast %cst_0 : f32 to vector<1x6144xf32>
    %10 = arith.mulf %9, %8 : vector<1x6144xf32>
    %11 = arith.subf %5, %10 : vector<1x6144xf32>
    %12 = vector.extract_strided_slice %3 {offsets = [0, 0], sizes = [8, 1], strides = [1, 1]} : vector<8x3xf32> to vector<8x1xf32>
    %13 = vector.extract_strided_slice %3 {offsets = [0, 1], sizes = [8, 1], strides = [1, 1]} : vector<8x3xf32> to vector<8x1xf32>
    %14 = vector.extract_strided_slice %3 {offsets = [0, 2], sizes = [8, 1], strides = [1, 1]} : vector<8x3xf32> to vector<8x1xf32>
    %cst_1 = arith.constant 5.000000e-01 : f32
    %15 = vector.broadcast %cst_1 : f32 to vector<1x6144xf32>
    %16 = arith.cmpf olt, %11, %15 : vector<1x6144xf32>
    %cst_2 = arith.constant 1.500000e+00 : f32
    %17 = vector.broadcast %cst_2 : f32 to vector<1x6144xf32>
    %18 = arith.cmpf olt, %11, %17 : vector<1x6144xf32>
    %19 = vector.shape_cast %18 : vector<1x6144xi1> to vector<1x6144xi1>
    %20 = vector.broadcast %19 : vector<1x6144xi1> to vector<8x6144xi1>
    %21 = vector.shape_cast %13 : vector<8x1xf32> to vector<8x1xf32>
    %22 = vector.broadcast %21 : vector<8x1xf32> to vector<8x6144xf32>
    %23 = vector.shape_cast %14 : vector<8x1xf32> to vector<8x1xf32>
    %24 = vector.broadcast %23 : vector<8x1xf32> to vector<8x6144xf32>
    %25 = arith.select %20, %22, %24 : vector<8x6144xi1>, vector<8x6144xf32>
    %26 = vector.shape_cast %16 : vector<1x6144xi1> to vector<1x6144xi1>
    %27 = vector.broadcast %26 : vector<1x6144xi1> to vector<8x6144xi1>
    %28 = vector.shape_cast %12 : vector<8x1xf32> to vector<8x1xf32>
    %29 = vector.broadcast %28 : vector<8x1xf32> to vector<8x6144xf32>
    %30 = arith.select %27, %29, %25 : vector<8x6144xi1>, vector<8x6144xf32>
    %c0_3 = arith.constant 0 : index
    %c0_4 = arith.constant 0 : index
    %31 = vector.load %arg3[%c0_3, %c0_4] : memref<1x6144xf32, #tpu.memory_space<vmem>>, vector<1x6144xf32>
    %32 = vector.broadcast %31 : vector<1x6144xf32> to vector<8x6144xf32>
    %33 = arith.subf %30, %32 : vector<8x6144xf32>
    %cst_5 = arith.constant -1.250000e-01 : f32
    %cst_6 = arith.constant 1.250000e-01 : f32
    %34 = vector.broadcast %cst_5 : f32 to vector<8x6144xf32>
    %35 = arith.maximumf %34, %33 : vector<8x6144xf32>
    %36 = vector.broadcast %cst_6 : f32 to vector<8x6144xf32>
    %37 = arith.minimumf %36, %35 : vector<8x6144xf32>
    %c0_7 = arith.constant 0 : index
    %c0_8 = arith.constant 0 : index
    %38 = vector.load %arg4[%c0_7, %c0_8] : memref<8x6144xf32, #tpu.memory_space<vmem>>, vector<8x6144xf32>
    tpu.vector_store %arg4[%c0_7, %c0_8], %37 {strides = array<i32>} : memref<8x6144xf32, #tpu.memory_space<vmem>>, vector<8x6144xf32>,
    return
  }
  func.func @transform_0(%arg0: i32, %arg1: i32) -> (i32, i32) {
    %c0_i32 = arith.constant 0 : i32
    %c0_i32_0 = arith.constant 0 : i32
    %c0_i32_1 = arith.constant 0 : i32
    return %c0_i32, %c0_i32_0 : i32, i32
  }
  func.func @transform_1(%arg0: i32, %arg1: i32) -> (i32, i32) {
    %c0_i32 = arith.constant 0 : i32
    %c0_i32_0 = arith.constant 0 : i32
    return %c0_i32, %arg0 : i32, i32
  }
  func.func @transform_2(%arg0: i32, %arg1: i32) -> (i32, i32) {
    %c0_i32 = arith.constant 0 : i32
    return %arg1, %arg0 : i32, i32
  }
}

</mosaic_0001>

<llo_original>
// kernel: tpu_custom_call.1
$region0: #{tpu_custom_call.1}
  #allocation0 [shape = 'u32[]', space=smem, size = 0x4, offset = 0x4, fixed_abs, tag = 'smem constant byte address 0x4 - core index']
  #allocation1 [shape = 'u32[144,128]{1,0:T(1,128)}', space=vmem, size = 0x12000, scoped, tag = 'internal scratch']
  %s0 = inlined_call_operand.vmem [shape: f32[8,3], index: 0, kind: input, shape index: {}]
  %s1 = inlined_call_operand.hbm [shape: f32[1,12288], index: 1, kind: input, shape index: {}]
  %s2 = inlined_call_operand.hbm [shape: f32[8,12288], index: 2, kind: output, shape index: {}]
  %s3 = sld [smem:[#allocation0]]
  $region45: #{tpu_custom_call.1} parent=0
    _
  %s5 = ssub.s32 1, %s3
  %s6 = scalar_select 0, %s5, %s3
  $region1: #{tpu_custom_call.1} parent=0
    #allocation2 [shape = 'u8[49152]{0}', space=vmem, size = 0xc000, scoped, tag = 'input window, operand 1']
    #allocation3 [shape = 's32[2]{0}', space=sflag, size = 0x8, scoped, tag = 'scoped memory for tpu_custom_call.1']
    #allocation4 [shape = 's32[2]{0}', space=sflag, size = 0x8, scoped, tag = 'scoped memory for tpu_custom_call.1']
    #allocation5 [shape = 'u8[393216]{0}', space=vmem, size = 0x60000, scoped, tag = 'output window, operand 0']
    %7 = vsyncpa [#allocation3], 0
    %s8 = scalar_lea.sflag [#allocation3], 1
    %9 = vsyncpa %s8, 0
    %10 = vsyncpa [#allocation4], 0
    %s11 = scalar_lea.sflag [#allocation4], 1
    %12 = vsyncpa %s11, 0
    loop: start=0, step=1, limit=4
    $region2: #{tpu_custom_call.1} parent=1 // loop_pre_header
      _
    $region3: #{tpu_custom_call.1} parent=1 // loop_header
      %s14 = sphi 0, %s18
      %p15 = scmp.ge.s32.totalorder %s14, 4
      %s21 = sphi 0, %s33
      %s22 = sphi 0, %s29
      %s23 = sphi 0, %s21
      %s24 = sphi 0, %s22
      %s25 = sphi 0, %s23
      %s26 = sphi 0, %s24
      %s34 = sphi 0, %s34
      %s36 = sphi 0, %s34
      %s37 = sphi 0, %s36
      %s51 = sphi 0, %s37
      %s57 = sphi 0, %s59
      %s60 = sphi 0, %s57
      %s61 = sphi 0, %s60
      %s77 = sphi 0, %s61
      %s85 = sphi 0, %s87
      %s88 = sphi 0, %s85
      %s89 = sphi 0, %s88
      %s105 = sphi 0, %s89
    $region4: #{tpu_custom_call.1} parent=1 // loop_header_branch
      %17 = sbr.rel (%p15) target = $region8
    $region5: #{tpu_custom_call.1} parent=1 // loop_body
      %s19 = ssub.s32 %s14, 1
      %s20 = ssub.s32 %s14, 2
      %s27 = sadd.s32 1, %s22
      %p28 = scmp.ge.s32.totalorder %s27, 1
      %s29 = scalar_select %p28, 0, %s27
      %s30 = sadd.s32 1, %s21
      %s31 = scalar_select %p28, %s30, %s21
      %p32 = scmp.ge.s32.totalorder %s31, 2
      %s33 = scalar_select %p32, 0, %s31
      %s35 = sadd.s32 %s34, 1
      %p38 = scmp.eq.s32.totalorder %s14, 1
      %p39 = scmp.ne.s32.totalorder %s34, %s36
      %p40 = scmp.eq.s32.totalorder %s14, 0
      %p41 = por %p39, %p40
      %p42 = scmp.ne.s32.totalorder %s34, %s36
      %p43 = scmp.eq.s32.totalorder %s19, 1
      %p44 = por %p42, %p43
      %p45 = scmp.ne.s32.totalorder %s36, %s37
      %p46 = scmp.eq.s32.totalorder %s19, 0
      %p47 = por %p45, %p46
      %p48 = scmp.ne.s32.totalorder %s36, %s37
      %p49 = scmp.eq.s32.totalorder %s20, 1
      %p50 = por %p48, %p49
      %p52 = scmp.ne.s32.totalorder %s37, %s51
      %p53 = scmp.eq.s32.totalorder %s20, 0
      %p54 = por %p52, %p53
      %s55 = ssub.s32 %s21, %s33
      %p56 = scmp.eq.s32.totalorder %s55, 0
      %s58 = sadd.s32 %s57, 1
      %s59 = scalar_select %p56, %s57, %s58
      %p62 = pneg %p56
      %p63 = scmp.eq.s32.totalorder %s14, 1
      %p64 = por %p62, %p63
      %p65 = scmp.ne.s32.totalorder %s57, %s60
      %p66 = scmp.eq.s32.totalorder %s14, 0
      %p67 = por %p65, %p66
      %p68 = scmp.ne.s32.totalorder %s57, %s60
      %p69 = scmp.eq.s32.totalorder %s19, 1
      %p70 = por %p68, %p69
      %p71 = scmp.ne.s32.totalorder %s60, %s61
      %p72 = scmp.eq.s32.totalorder %s19, 0
      %p73 = por %p71, %p72
      %p74 = scmp.ne.s32.totalorder %s60, %s61
      %p75 = scmp.eq.s32.totalorder %s20, 1
      %p76 = por %p74, %p75
      %p78 = scmp.ne.s32.totalorder %s61, %s77
      %p79 = scmp.eq.s32.totalorder %s20, 0
      %p80 = por %p78, %p79
      %s81 = ssub.s32 %s22, %s29
      %s82 = ssub.s32 %s21, %s33
      %s83 = sor.u32 %s81, %s82
      %p84 = scmp.eq.s32.totalorder %s83, 0
      %s86 = sadd.s32 %s85, 1
      %s87 = scalar_select %p84, %s85, %s86
      %p90 = pneg %p84
      %p91 = scmp.eq.s32.totalorder %s14, 1
      %p92 = por %p90, %p91
      %p93 = scmp.ne.s32.totalorder %s85, %s88
      %p94 = scmp.eq.s32.totalorder %s14, 0
      %p95 = por %p93, %p94
      %p96 = scmp.ne.s32.totalorder %s85, %s88
      %p97 = scmp.eq.s32.totalorder %s19, 1
      %p98 = por %p96, %p97
      %p99 = scmp.ne.s32.totalorder %s88, %s89
      %p100 = scmp.eq.s32.totalorder %s19, 0
      %p101 = por %p99, %p100
      %p102 = scmp.ne.s32.totalorder %s88, %s89
      %p103 = scmp.eq.s32.totalorder %s20, 1
      %p104 = por %p102, %p103
      %p106 = scmp.ne.s32.totalorder %s89, %s105
      %p107 = scmp.eq.s32.totalorder %s20, 0
      %p108 = por %p106, %p107
      %p109 = scmp.le.s32.totalorder 1, %s14
      %p110 = scmp.lt.s32.totalorder %s14, 3
      %p111 = pnand %p109, %p110
      %p112 = pneg %p111
      // Predicated region
      $region9: #{tpu_custom_call.1} parent=5 // pred_check
        _
      $region10: #{tpu_custom_call.1} parent=5 // pred_check_branch
        %114 = sbr.rel (%p111) target = $region12
      $region11: #{tpu_custom_call.1} parent=5 // pred_region
        %s115 = ssub.s32 %s14, 1
        // Predicated region
        $region13: #{tpu_custom_call.1} parent=11 // pred_check
          %p116 = pneg %p47
        $region14: #{tpu_custom_call.1} parent=11 // pred_check_branch
          %118 = sbr.rel (%p116) target = $region16
        $region15: #{tpu_custom_call.1} parent=11 // pred_region
          _
        $region16: #{tpu_custom_call.1} parent=11 // pred_fallthru
          _
      $region12: #{tpu_custom_call.1} parent=5 // pred_fallthru
        _
      %p119 = scmp.lt.s32.totalorder %s14, 2
      // Predicated region
      $region17: #{tpu_custom_call.1} parent=5 // pred_check
        %p120 = pneg %p119
      $region18: #{tpu_custom_call.1} parent=5 // pred_check_branch
        %122 = sbr.rel (%p120) target = $region20
      $region19: #{tpu_custom_call.1} parent=5 // pred_region
        // Predicated region
        $region21: #{tpu_custom_call.1} parent=19 // pred_check
          %p123 = pneg %p67
        $region22: #{tpu_custom_call.1} parent=19 // pred_check_branch
          %125 = sbr.rel (%p123) target = $region24
        $region23: #{tpu_custom_call.1} parent=19 // pred_region
          %s126 = sand.u32 %s57, 1
          %s127 = scalar_lea.sflag [#allocation3], %s126
          %s128 = sand.u32 %s57, 1
          %s129 = smul.addr %s128, 48
          %s130 = scalar_lea.vmem [#allocation2], %s129
          %s131 = smul.u32 48, %s21
          %s133 = ssub.s32 768, 768
          %134 = vsyncadd %s127, %s133
          %s135 = smul.addr %s131, 16
          %s136 = scalar_lea.hbm %s1, %s135
          %s138 = sshll.u32 %s130, 4
          %s139 = int_to_ptr.vmem [resolvable:$true] %s138
          %141 = dma.hbm_to_vmem [thread:$0]  %s136, 768, %s139, %s127
        $region24: #{tpu_custom_call.1} parent=19 // pred_fallthru
          _
      $region20: #{tpu_custom_call.1} parent=5 // pred_fallthru
        _
      %p142 = scmp.le.s32.totalorder 1, %s14
      %p143 = scmp.lt.s32.totalorder %s14, 3
      %p144 = pnand %p142, %p143
      %p145 = pneg %p144
      // Predicated region
      $region25: #{tpu_custom_call.1} parent=5 // pred_check
        _
      $region26: #{tpu_custom_call.1} parent=5 // pred_check_branch
        %147 = sbr.rel (%p144) target = $region28
      $region27: #{tpu_custom_call.1} parent=5 // pred_region
        %s148 = ssub.s32 %s14, 1
        %s149 = sand.u32 %s60, 1
        %s150 = scalar_lea.sflag [#allocation3], %s149
        %s151 = sand.u32 %s60, 1
        %s152 = smul.addr %s151, 48
        %s153 = scalar_lea.vmem [#allocation2], %s152
        // Predicated region
        $region29: #{tpu_custom_call.1} parent=27 // pred_check
          %p154 = pneg %p73
        $region30: #{tpu_custom_call.1} parent=27 // pred_check_branch
          %156 = sbr.rel (%p154) target = $region32
        $region31: #{tpu_custom_call.1} parent=27 // pred_region
          %157 = dma.done %s150, 768
        $region32: #{tpu_custom_call.1} parent=27 // pred_fallthru
          _
        %p158 = pneg %p47
        %p159 = pneg %p44
        %s160 = sand.u32 %s60, 1
        %s161 = scalar_lea.sflag [#allocation3], %s160
        %s162 = sand.u32 %s60, 1
        %s163 = smul.addr %s162, 48
        %s164 = scalar_lea.vmem [#allocation2], %s163
        %p165 = pneg %p73
        %p166 = pneg %p70
        %p167 = pneg %p101
        %p168 = pneg %p98
        %s169 = sand.u32 %s88, 1
        %s170 = scalar_lea.sflag [#allocation4], %s169
        %s171 = sand.u32 %s88, 1
        %s172 = smul.addr %s171, 384
        %s173 = scalar_lea.vmem [#allocation5], %s172
        %s174 = smul.u32 48, %s23
        %s175 = smul.u32 48, %s23
        %s176 = smul.u32 %s24, 8
        %s177 = scalar_lea.vmem %s0, %s176
        %v178 = vld [vmem:[%s177] sm:$0xff]
        %v179 = vlaneseq
        %v180 = vand.u32 %v179, 127
        %v181 = vadd.s32 %v180, 128
        %v182 = vadd.s32 %v180, 256
        %v183 = vadd.s32 %v180, 384
        %v184 = vadd.s32 %v180, 512
        %v185 = vadd.s32 %v180, 640
        %v186 = vadd.s32 %v180, 768
        %v187 = vadd.s32 %v180, 896
        %v188 = vadd.s32 %v180, 1024
        %v189 = vadd.s32 %v180, 1152
        %v190 = vadd.s32 %v180, 1280
        %v191 = vadd.s32 %v180, 1408
        %v192 = vadd.s32 %v180, 1536
        %v193 = vadd.s32 %v180, 1664
        %v194 = vadd.s32 %v180, 1792
        %v195 = vadd.s32 %v180, 1920
        %v196 = vadd.s32 %v180, 2048
        %v197 = vadd.s32 %v180, 2176
        %v198 = vadd.s32 %v180, 2304
        %v199 = vadd.s32 %v180, 2432
        %v200 = vadd.s32 %v180, 2560
        %v201 = vadd.s32 %v180, 2688
        %v202 = vadd.s32 %v180, 2816
        %v203 = vadd.s32 %v180, 2944
        %v204 = vadd.s32 %v180, 3072
        %v205 = vadd.s32 %v180, 3200
        %v206 = vadd.s32 %v180, 3328
        %v207 = vadd.s32 %v180, 3456
        %v208 = vadd.s32 %v180, 3584
        %v209 = vadd.s32 %v180, 3712
        %v210 = vadd.s32 %v180, 3840
        %v211 = vadd.s32 %v180, 3968
        %v212 = vadd.s32 %v180, 4096
        %v213 = vadd.s32 %v180, 4224
        %v214 = vadd.s32 %v180, 4352
        %v215 = vadd.s32 %v180, 4480
        %v216 = vadd.s32 %v180, 4608
        %v217 = vadd.s32 %v180, 4736
        %v218 = vadd.s32 %v180, 4864
        %v219 = vadd.s32 %v180, 4992
        %v220 = vadd.s32 %v180, 5120
        %v221 = vadd.s32 %v180, 5248
        %v222 = vadd.s32 %v180, 5376
        %v223 = vadd.s32 %v180, 5504
        %v224 = vadd.s32 %v180, 5632
        %v225 = vadd.s32 %v180, 5760
        %v226 = vadd.s32 %v180, 5888
        %v227 = vadd.s32 %v180, 6016
        %v228 = vcvt.s32.f32 %v180
        %v229 = vcvt.s32.f32 %v181
        %v230 = vcvt.s32.f32 %v182
        %v231 = vcvt.s32.f32 %v183
        %v232 = vcvt.s32.f32 %v184
        %v233 = vcvt.s32.f32 %v185
        %v234 = vcvt.s32.f32 %v186
        %v235 = vcvt.s32.f32 %v187
        %v236 = vcvt.s32.f32 %v188
        %v237 = vcvt.s32.f32 %v189
        %v238 = vcvt.s32.f32 %v190
        %v239 = vcvt.s32.f32 %v191
        %v240 = vcvt.s32.f32 %v192
        %v241 = vcvt.s32.f32 %v193
        %v242 = vcvt.s32.f32 %v194
        %v243 = vcvt.s32.f32 %v195
        %v244 = vcvt.s32.f32 %v196
        %v245 = vcvt.s32.f32 %v197
        %v246 = vcvt.s32.f32 %v198
        %v247 = vcvt.s32.f32 %v199
        %v248 = vcvt.s32.f32 %v200
        %v249 = vcvt.s32.f32 %v201
        %v250 = vcvt.s32.f32 %v202
        %v251 = vcvt.s32.f32 %v203
        %v252 = vcvt.s32.f32 %v204
        %v253 = vcvt.s32.f32 %v205
        %v254 = vcvt.s32.f32 %v206
        %v255 = vcvt.s32.f32 %v207
        %v256 = vcvt.s32.f32 %v208
        %v257 = vcvt.s32.f32 %v209
        %v258 = vcvt.s32.f32 %v210
        %v259 = vcvt.s32.f32 %v211
        %v260 = vcvt.s32.f32 %v212
        %v261 = vcvt.s32.f32 %v213
        %v262 = vcvt.s32.f32 %v214
        %v263 = vcvt.s32.f32 %v215
        %v264 = vcvt.s32.f32 %v216
        %v265 = vcvt.s32.f32 %v217
        %v266 = vcvt.s32.f32 %v218
        %v267 = vcvt.s32.f32 %v219
        %v268 = vcvt.s32.f32 %v220
        %v269 = vcvt.s32.f32 %v221
        %v270 = vcvt.s32.f32 %v222
        %v271 = vcvt.s32.f32 %v223
        %v272 = vcvt.s32.f32 %v224
        %v273 = vcvt.s32.f32 %v225
        %v274 = vcvt.s32.f32 %v226
        %v275 = vcvt.s32.f32 %v227
        %v276 = vmul.f32 %v228, 0.33333334
        %v277 = vmul.f32 %v229, 0.33333334
        %v278 = vmul.f32 %v230, 0.33333334
        %v279 = vmul.f32 %v231, 0.33333334
        %v280 = vmul.f32 %v232, 0.33333334
        %v281 = vmul.f32 %v233, 0.33333334
        %v282 = vmul.f32 %v234, 0.33333334
        %v283 = vmul.f32 %v235, 0.33333334
        %v284 = vmul.f32 %v236, 0.33333334
        %v285 = vmul.f32 %v237, 0.33333334
        %v286 = vmul.f32 %v238, 0.33333334
        %v287 = vmul.f32 %v239, 0.33333334
        %v288 = vmul.f32 %v240, 0.33333334
        %v289 = vmul.f32 %v241, 0.33333334
        %v290 = vmul.f32 %v242, 0.33333334
        %v291 = vmul.f32 %v243, 0.33333334
        %v292 = vmul.f32 %v244, 0.33333334
        %v293 = vmul.f32 %v245, 0.33333334
        %v294 = vmul.f32 %v246, 0.33333334
        %v295 = vmul.f32 %v247, 0.33333334
        %v296 = vmul.f32 %v248, 0.33333334
        %v297 = vmul.f32 %v249, 0.33333334
        %v298 = vmul.f32 %v250, 0.33333334
        %v299 = vmul.f32 %v251, 0.33333334
        %v300 = vmul.f32 %v252, 0.33333334
        %v301 = vmul.f32 %v253, 0.33333334
        %v302 = vmul.f32 %v254, 0.33333334
        %v303 = vmul.f32 %v255, 0.33333334
        %v304 = vmul.f32 %v256, 0.33333334
        %v305 = vmul.f32 %v257, 0.33333334
        %v306 = vmul.f32 %v258, 0.33333334
        %v307 = vmul.f32 %v259, 0.33333334
        %v308 = vmul.f32 %v260, 0.33333334
        %v309 = vmul.f32 %v261, 0.33333334
        %v310 = vmul.f32 %v262, 0.33333334
        %v311 = vmul.f32 %v263, 0.33333334
        %v312 = vmul.f32 %v264, 0.33333334
        %v313 = vmul.f32 %v265, 0.33333334
        %v314 = vmul.f32 %v266, 0.33333334
        %v315 = vmul.f32 %v267, 0.33333334
        %v316 = vmul.f32 %v268, 0.33333334
        %v317 = vmul.f32 %v269, 0.33333334
        %v318 = vmul.f32 %v270, 0.33333334
        %v319 = vmul.f32 %v271, 0.33333334
        %v320 = vmul.f32 %v272, 0.33333334
        %v321 = vmul.f32 %v273, 0.33333334
        %v322 = vmul.f32 %v274, 0.33333334
        %v323 = vmul.f32 %v275, 0.33333334
        %v324 = vfloor.f32 %v276
        %v325 = vfloor.f32 %v277
        %v326 = vfloor.f32 %v278
        %v327 = vfloor.f32 %v279
        %v328 = vfloor.f32 %v280
        %v329 = vfloor.f32 %v281
        %v330 = vfloor.f32 %v282
        %v331 = vfloor.f32 %v283
        %v332 = vfloor.f32 %v284
        %v333 = vfloor.f32 %v285
        %v334 = vfloor.f32 %v286
        %v335 = vfloor.f32 %v287
        %v336 = vfloor.f32 %v288
        %v337 = vfloor.f32 %v289
        %v338 = vfloor.f32 %v290
        %v339 = vfloor.f32 %v291
        %v340 = vfloor.f32 %v292
        %v341 = vfloor.f32 %v293
        %v342 = vfloor.f32 %v294
        %v343 = vfloor.f32 %v295
        %v344 = vfloor.f32 %v296
        %v345 = vfloor.f32 %v297
        %v346 = vfloor.f32 %v298
        %v347 = vfloor.f32 %v299
        %v348 = vfloor.f32 %v300
        %v349 = vfloor.f32 %v301
        %v350 = vfloor.f32 %v302
        %v351 = vfloor.f32 %v303
        %v352 = vfloor.f32 %v304
        %v353 = vfloor.f32 %v305
        %v354 = vfloor.f32 %v306
        %v355 = vfloor.f32 %v307
        %v356 = vfloor.f32 %v308
        %v357 = vfloor.f32 %v309
        %v358 = vfloor.f32 %v310
        %v359 = vfloor.f32 %v311
        %v360 = vfloor.f32 %v312
        %v361 = vfloor.f32 %v313
        %v362 = vfloor.f32 %v314
        %v363 = vfloor.f32 %v315
        %v364 = vfloor.f32 %v316
        %v365 = vfloor.f32 %v317
        %v366 = vfloor.f32 %v318
        %v367 = vfloor.f32 %v319
        %v368 = vfloor.f32 %v320
        %v369 = vfloor.f32 %v321
        %v370 = vfloor.f32 %v322
        %v371 = vfloor.f32 %v323
        %v372 = vmul.f32 %v324, 3.0
        %v373 = vmul.f32 %v325, 3.0
        %v374 = vmul.f32 %v326, 3.0
        %v375 = vmul.f32 %v327, 3.0
        %v376 = vmul.f32 %v328, 3.0
        %v377 = vmul.f32 %v329, 3.0
        %v378 = vmul.f32 %v330, 3.0
        %v379 = vmul.f32 %v331, 3.0
        %v380 = vmul.f32 %v332, 3.0
        %v381 = vmul.f32 %v333, 3.0
        %v382 = vmul.f32 %v334, 3.0
        %v383 = vmul.f32 %v335, 3.0
        %v384 = vmul.f32 %v336, 3.0
        %v385 = vmul.f32 %v337, 3.0
        %v386 = vmul.f32 %v338, 3.0
        %v387 = vmul.f32 %v339, 3.0
        %v388 = vmul.f32 %v340, 3.0
        %v389 = vmul.f32 %v341, 3.0
        %v390 = vmul.f32 %v342, 3.0
        %v391 = vmul.f32 %v343, 3.0
        %v392 = vmul.f32 %v344, 3.0
        %v393 = vmul.f32 %v345, 3.0
        %v394 = vmul.f32 %v346, 3.0
        %v395 = vmul.f32 %v347, 3.0
        %v396 = vmul.f32 %v348, 3.0
        %v397 = vmul.f32 %v349, 3.0
        %v398 = vmul.f32 %v350, 3.0
        %v399 = vmul.f32 %v351, 3.0
        %v400 = vmul.f32 %v352, 3.0
        %v401 = vmul.f32 %v353, 3.0
        %v402 = vmul.f32 %v354, 3.0
        %v403 = vmul.f32 %v355, 3.0
        %v404 = vmul.f32 %v356, 3.0
        %v405 = vmul.f32 %v357, 3.0
        %v406 = vmul.f32 %v358, 3.0
        %v407 = vmul.f32 %v359, 3.0
        %v408 = vmul.f32 %v360, 3.0
        %v409 = vmul.f32 %v361, 3.0
        %v410 = vmul.f32 %v362, 3.0
        %v411 = vmul.f32 %v363, 3.0
        %v412 = vmul.f32 %v364, 3.0
        %v413 = vmul.f32 %v365, 3.0
        %v414 = vmul.f32 %v366, 3.0
        %v415 = vmul.f32 %v367, 3.0
        %v416 = vmul.f32 %v368, 3.0
        %v417 = vmul.f32 %v369, 3.0
        %v418 = vmul.f32 %v370, 3.0
        %v419 = vmul.f32 %v371, 3.0
        %v420 = vsub.f32 %v228, %v372
        %v421 = vsub.f32 %v229, %v373
        %v422 = vsub.f32 %v230, %v374
        %v423 = vsub.f32 %v231, %v375
        %v424 = vsub.f32 %v232, %v376
        %v425 = vsub.f32 %v233, %v377
        %v426 = vsub.f32 %v234, %v378
        %v427 = vsub.f32 %v235, %v379
        %v428 = vsub.f32 %v236, %v380
        %v429 = vsub.f32 %v237, %v381
        %v430 = vsub.f32 %v238, %v382
        %v431 = vsub.f32 %v239, %v383
        %v432 = vsub.f32 %v240, %v384
        %v433 = vsub.f32 %v241, %v385
        %v434 = vsub.f32 %v242, %v386
        %v435 = vsub.f32 %v243, %v387
        %v436 = vsub.f32 %v244, %v388
        %v437 = vsub.f32 %v245, %v389
        %v438 = vsub.f32 %v246, %v390
        %v439 = vsub.f32 %v247, %v391
        %v440 = vsub.f32 %v248, %v392
        %v441 = vsub.f32 %v249, %v393
        %v442 = vsub.f32 %v250, %v394
        %v443 = vsub.f32 %v251, %v395
        %v444 = vsub.f32 %v252, %v396
        %v445 = vsub.f32 %v253, %v397
        %v446 = vsub.f32 %v254, %v398
        %v447 = vsub.f32 %v255, %v399
        %v448 = vsub.f32 %v256, %v400
        %v449 = vsub.f32 %v257, %v401
        %v450 = vsub.f32 %v258, %v402
        %v451 = vsub.f32 %v259, %v403
        %v452 = vsub.f32 %v260, %v404
        %v453 = vsub.f32 %v261, %v405
        %v454 = vsub.f32 %v262, %v406
        %v455 = vsub.f32 %v263, %v407
        %v456 = vsub.f32 %v264, %v408
        %v457 = vsub.f32 %v265, %v409
        %v458 = vsub.f32 %v266, %v410
        %v459 = vsub.f32 %v267, %v411
        %v460 = vsub.f32 %v268, %v412
        %v461 = vsub.f32 %v269, %v413
        %v462 = vsub.f32 %v270, %v414
        %v463 = vsub.f32 %v271, %v415
        %v464 = vsub.f32 %v272, %v416
        %v465 = vsub.f32 %v273, %v417
        %v466 = vsub.f32 %v274, %v418
        %v467 = vsub.f32 %v275, %v419
        %vm468 = vcmp.lt.f32.partialorder %v420, 0.5
        %vm469 = vcmp.lt.f32.partialorder %v421, 0.5
        %vm470 = vcmp.lt.f32.partialorder %v422, 0.5
        %vm471 = vcmp.lt.f32.partialorder %v423, 0.5
        %vm472 = vcmp.lt.f32.partialorder %v424, 0.5
        %vm473 = vcmp.lt.f32.partialorder %v425, 0.5
        %vm474 = vcmp.lt.f32.partialorder %v426, 0.5
        %vm475 = vcmp.lt.f32.partialorder %v427, 0.5
        %vm476 = vcmp.lt.f32.partialorder %v428, 0.5
        %vm477 = vcmp.lt.f32.partialorder %v429, 0.5
        %vm478 = vcmp.lt.f32.partialorder %v430, 0.5
        %vm479 = vcmp.lt.f32.partialorder %v431, 0.5
        %vm480 = vcmp.lt.f32.partialorder %v432, 0.5
        %vm481 = vcmp.lt.f32.partialorder %v433, 0.5
        %vm482 = vcmp.lt.f32.partialorder %v434, 0.5
        %vm483 = vcmp.lt.f32.partialorder %v435, 0.5
        %vm484 = vcmp.lt.f32.partialorder %v436, 0.5
        %vm485 = vcmp.lt.f32.partialorder %v437, 0.5
        %vm486 = vcmp.lt.f32.partialorder %v438, 0.5
        %vm487 = vcmp.lt.f32.partialorder %v439, 0.5
        %vm488 = vcmp.lt.f32.partialorder %v440, 0.5
        %vm489 = vcmp.lt.f32.partialorder %v441, 0.5
        %vm490 = vcmp.lt.f32.partialorder %v442, 0.5
        %vm491 = vcmp.lt.f32.partialorder %v443, 0.5
        %vm492 = vcmp.lt.f32.partialorder %v444, 0.5
        %vm493 = vcmp.lt.f32.partialorder %v445, 0.5
        %vm494 = vcmp.lt.f32.partialorder %v446, 0.5
        %vm495 = vcmp.lt.f32.partialorder %v447, 0.5
        %vm496 = vcmp.lt.f32.partialorder %v448, 0.5
        %vm497 = vcmp.lt.f32.partialorder %v449, 0.5
        %vm498 = vcmp.lt.f32.partialorder %v450, 0.5
        %vm499 = vcmp.lt.f32.partialorder %v451, 0.5
        %vm500 = vcmp.lt.f32.partialorder %v452, 0.5
        %vm501 = vcmp.lt.f32.partialorder %v453, 0.5
        %vm502 = vcmp.lt.f32.partialorder %v454, 0.5
        %vm503 = vcmp.lt.f32.partialorder %v455, 0.5
        %vm504 = vcmp.lt.f32.partialorder %v456, 0.5
        %vm505 = vcmp.lt.f32.partialorder %v457, 0.5
        %vm506 = vcmp.lt.f32.partialorder %v458, 0.5
        %vm507 = vcmp.lt.f32.partialorder %v459, 0.5
        %vm508 = vcmp.lt.f32.partialorder %v460, 0.5
        %vm509 = vcmp.lt.f32.partialorder %v461, 0.5
        %vm510 = vcmp.lt.f32.partialorder %v462, 0.5
        %vm511 = vcmp.lt.f32.partialorder %v463, 0.5
        %vm512 = vcmp.lt.f32.partialorder %v464, 0.5
        %vm513 = vcmp.lt.f32.partialorder %v465, 0.5
        %vm514 = vcmp.lt.f32.partialorder %v466, 0.5
        %vm515 = vcmp.lt.f32.partialorder %v467, 0.5
        %vm516 = vcmp.lt.f32.partialorder %v420, 1.5
        %vm517 = vcmp.lt.f32.partialorder %v421, 1.5
        %vm518 = vcmp.lt.f32.partialorder %v422, 1.5
        %vm519 = vcmp.lt.f32.partialorder %v423, 1.5
        %vm520 = vcmp.lt.f32.partialorder %v424, 1.5
        %vm521 = vcmp.lt.f32.partialorder %v425, 1.5
        %vm522 = vcmp.lt.f32.partialorder %v426, 1.5
        %vm523 = vcmp.lt.f32.partialorder %v427, 1.5
        %vm524 = vcmp.lt.f32.partialorder %v428, 1.5
        %vm525 = vcmp.lt.f32.partialorder %v429, 1.5
        %vm526 = vcmp.lt.f32.partialorder %v430, 1.5
        %vm527 = vcmp.lt.f32.partialorder %v431, 1.5
        %vm528 = vcmp.lt.f32.partialorder %v432, 1.5
        %vm529 = vcmp.lt.f32.partialorder %v433, 1.5
        %vm530 = vcmp.lt.f32.partialorder %v434, 1.5
        %vm531 = vcmp.lt.f32.partialorder %v435, 1.5
        %vm532 = vcmp.lt.f32.partialorder %v436, 1.5
        %vm533 = vcmp.lt.f32.partialorder %v437, 1.5
        %vm534 = vcmp.lt.f32.partialorder %v438, 1.5
        %vm535 = vcmp.lt.f32.partialorder %v439, 1.5
        %vm536 = vcmp.lt.f32.partialorder %v440, 1.5
        %vm537 = vcmp.lt.f32.partialorder %v441, 1.5
        %vm538 = vcmp.lt.f32.partialorder %v442, 1.5
        %vm539 = vcmp.lt.f32.partialorder %v443, 1.5
        %vm540 = vcmp.lt.f32.partialorder %v444, 1.5
        %vm541 = vcmp.lt.f32.partialorder %v445, 1.5
        %vm542 = vcmp.lt.f32.partialorder %v446, 1.5
        %vm543 = vcmp.lt.f32.partialorder %v447, 1.5
        %vm544 = vcmp.lt.f32.partialorder %v448, 1.5
        %vm545 = vcmp.lt.f32.partialorder %v449, 1.5
        %vm546 = vcmp.lt.f32.partialorder %v450, 1.5
        %vm547 = vcmp.lt.f32.partialorder %v451, 1.5
        %vm548 = vcmp.lt.f32.partialorder %v452, 1.5
        %vm549 = vcmp.lt.f32.partialorder %v453, 1.5
        %vm550 = vcmp.lt.f32.partialorder %v454, 1.5
        %vm551 = vcmp.lt.f32.partialorder %v455, 1.5
        %vm552 = vcmp.lt.f32.partialorder %v456, 1.5
        %vm553 = vcmp.lt.f32.partialorder %v457, 1.5
        %vm554 = vcmp.lt.f32.partialorder %v458, 1.5
        %vm555 = vcmp.lt.f32.partialorder %v459, 1.5
        %vm556 = vcmp.lt.f32.partialorder %v460, 1.5
        %vm557 = vcmp.lt.f32.partialorder %v461, 1.5
        %vm558 = vcmp.lt.f32.partialorder %v462, 1.5
        %vm559 = vcmp.lt.f32.partialorder %v463, 1.5
        %vm560 = vcmp.lt.f32.partialorder %v464, 1.5
        %vm561 = vcmp.lt.f32.partialorder %v465, 1.5
        %vm562 = vcmp.lt.f32.partialorder %v466, 1.5
        %vm563 = vcmp.lt.f32.partialorder %v467, 1.5
        %v564 = vsel %vm516, 1, 0
        %v565 = vsel %vm517, 1, 0
        %v566 = vsel %vm518, 1, 0
        %v567 = vsel %vm519, 1, 0
        %v568 = vsel %vm520, 1, 0
        %v569 = vsel %vm521, 1, 0
        %v570 = vsel %vm522, 1, 0
        %v571 = vsel %vm523, 1, 0
        %v572 = vsel %vm524, 1, 0
        %v573 = vsel %vm525, 1, 0
        %v574 = vsel %vm526, 1, 0
        %v575 = vsel %vm527, 1, 0
        %v576 = vsel %vm528, 1, 0
        %v577 = vsel %vm529, 1, 0
        %v578 = vsel %vm530, 1, 0
        %v579 = vsel %vm531, 1, 0
        %v580 = vsel %vm532, 1, 0
        %v581 = vsel %vm533, 1, 0
        %v582 = vsel %vm534, 1, 0
        %v583 = vsel %vm535, 1, 0
        %v584 = vsel %vm536, 1, 0
        %v585 = vsel %vm537, 1, 0
        %v586 = vsel %vm538, 1, 0
        %v587 = vsel %vm539, 1, 0
        %v588 = vsel %vm540, 1, 0
        %v589 = vsel %vm541, 1, 0
        %v590 = vsel %vm542, 1, 0
        %v591 = vsel %vm543, 1, 0
        %v592 = vsel %vm544, 1, 0
        %v593 = vsel %vm545, 1, 0
        %v594 = vsel %vm546, 1, 0
        %v595 = vsel %vm547, 1, 0
        %v596 = vsel %vm548, 1, 0
        %v597 = vsel %vm549, 1, 0
        %v598 = vsel %vm550, 1, 0
        %v599 = vsel %vm551, 1, 0
        %v600 = vsel %vm552, 1, 0
        %v601 = vsel %vm553, 1, 0
        %v602 = vsel %vm554, 1, 0
        %v603 = vsel %vm555, 1, 0
        %v604 = vsel %vm556, 1, 0
        %v605 = vsel %vm557, 1, 0
        %v606 = vsel %vm558, 1, 0
        %v607 = vsel %vm559, 1, 0
        %v608 = vsel %vm560, 1, 0
        %v609 = vsel %vm561, 1, 0
        %v610 = vsel %vm562, 1, 0
        %v611 = vsel %vm563, 1, 0
        %vm612 = vcmp.eq.s32.totalorder %v564, 1
        %vm613 = vcmp.eq.s32.totalorder %v565, 1
        %vm614 = vcmp.eq.s32.totalorder %v566, 1
        %vm615 = vcmp.eq.s32.totalorder %v567, 1
        %vm616 = vcmp.eq.s32.totalorder %v568, 1
        %vm617 = vcmp.eq.s32.totalorder %v569, 1
        %vm618 = vcmp.eq.s32.totalorder %v570, 1
        %vm619 = vcmp.eq.s32.totalorder %v571, 1
        %vm620 = vcmp.eq.s32.totalorder %v572, 1
        %vm621 = vcmp.eq.s32.totalorder %v573, 1
        %vm622 = vcmp.eq.s32.totalorder %v574, 1
        %vm623 = vcmp.eq.s32.totalorder %v575, 1
        %vm624 = vcmp.eq.s32.totalorder %v576, 1
        %vm625 = vcmp.eq.s32.totalorder %v577, 1
        %vm626 = vcmp.eq.s32.totalorder %v578, 1
        %vm627 = vcmp.eq.s32.totalorder %v579, 1
        %vm628 = vcmp.eq.s32.totalorder %v580, 1
        %vm629 = vcmp.eq.s32.totalorder %v581, 1
        %vm630 = vcmp.eq.s32.totalorder %v582, 1
        %vm631 = vcmp.eq.s32.totalorder %v583, 1
        %vm632 = vcmp.eq.s32.totalorder %v584, 1
        %vm633 = vcmp.eq.s32.totalorder %v585, 1
        %vm634 = vcmp.eq.s32.totalorder %v586, 1
        %vm635 = vcmp.eq.s32.totalorder %v587, 1
        %vm636 = vcmp.eq.s32.totalorder %v588, 1
        %vm637 = vcmp.eq.s32.totalorder %v589, 1
        %vm638 = vcmp.eq.s32.totalorder %v590, 1
        %vm639 = vcmp.eq.s32.totalorder %v591, 1
        %vm640 = vcmp.eq.s32.totalorder %v592, 1
        %vm641 = vcmp.eq.s32.totalorder %v593, 1
        %vm642 = vcmp.eq.s32.totalorder %v594, 1
        %vm643 = vcmp.eq.s32.totalorder %v595, 1
        %vm644 = vcmp.eq.s32.totalorder %v596, 1
        %vm645 = vcmp.eq.s32.totalorder %v597, 1
        %vm646 = vcmp.eq.s32.totalorder %v598, 1
        %vm647 = vcmp.eq.s32.totalorder %v599, 1
        %vm648 = vcmp.eq.s32.totalorder %v600, 1
        %vm649 = vcmp.eq.s32.totalorder %v601, 1
        %vm650 = vcmp.eq.s32.totalorder %v602, 1
        %vm651 = vcmp.eq.s32.totalorder %v603, 1
        %vm652 = vcmp.eq.s32.totalorder %v604, 1
        %vm653 = vcmp.eq.s32.totalorder %v605, 1
        %vm654 = vcmp.eq.s32.totalorder %v606, 1
        %vm655 = vcmp.eq.s32.totalorder %v607, 1
        %vm656 = vcmp.eq.s32.totalorder %v608, 1
        %vm657 = vcmp.eq.s32.totalorder %v609, 1
        %vm658 = vcmp.eq.s32.totalorder %v610, 1
        %vm659 = vcmp.eq.s32.totalorder %v611, 1
        %661 = vset.pattern.permute.xlu0 1
        %662 = vperm.xlu0 %661, %v178
        %v663 = vpop.permute.xlu0 %662
        %665 = vset.pattern.permute.xlu0 2
        %666 = vperm.xlu0 %665, %v178
        %v667 = vpop.permute.xlu0 %666
        %v669 = vsel %vm612, %v663, %v667
        %v670 = vsel %vm613, %v663, %v667
        %v671 = vsel %vm614, %v663, %v667
        %v672 = vsel %vm615, %v663, %v667
        %v673 = vsel %vm616, %v663, %v667
        %v674 = vsel %vm617, %v663, %v667
        %v675 = vsel %vm618, %v663, %v667
        %v676 = vsel %vm619, %v663, %v667
        %v677 = vsel %vm620, %v663, %v667
        %v678 = vsel %vm621, %v663, %v667
        %v679 = vsel %vm622, %v663, %v667
        %v680 = vsel %vm623, %v663, %v667
        %v681 = vsel %vm624, %v663, %v667
        %v682 = vsel %vm625, %v663, %v667
        %v683 = vsel %vm626, %v663, %v667
        %v684 = vsel %vm627, %v663, %v667
        %v685 = vsel %vm628, %v663, %v667
        %v686 = vsel %vm629, %v663, %v667
        %v687 = vsel %vm630, %v663, %v667
        %v688 = vsel %vm631, %v663, %v667
        %v689 = vsel %vm632, %v663, %v667
        %v690 = vsel %vm633, %v663, %v667
        %v691 = vsel %vm634, %v663, %v667
        %v692 = vsel %vm635, %v663, %v667
        %v693 = vsel %vm636, %v663, %v667
        %v694 = vsel %vm637, %v663, %v667
        %v695 = vsel %vm638, %v663, %v667
        %v696 = vsel %vm639, %v663, %v667
        %v697 = vsel %vm640, %v663, %v667
        %v698 = vsel %vm641, %v663, %v667
        %v699 = vsel %vm642, %v663, %v667
        %v700 = vsel %vm643, %v663, %v667
        %v701 = vsel %vm644, %v663, %v667
        %v702 = vsel %vm645, %v663, %v667
        %v703 = vsel %vm646, %v663, %v667
        %v704 = vsel %vm647, %v663, %v667
        %v705 = vsel %vm648, %v663, %v667
        %v706 = vsel %vm649, %v663, %v667
        %v707 = vsel %vm650, %v663, %v667
        %v708 = vsel %vm651, %v663, %v667
        %v709 = vsel %vm652, %v663, %v667
        %v710 = vsel %vm653, %v663, %v667
        %v711 = vsel %vm654, %v663, %v667
        %v712 = vsel %vm655, %v663, %v667
        %v713 = vsel %vm656, %v663, %v667
        %v714 = vsel %vm657, %v663, %v667
        %v715 = vsel %vm658, %v663, %v667
        %v716 = vsel %vm659, %v663, %v667
        %v717 = vsel %vm468, 1, 0
        %v718 = vsel %vm469, 1, 0
        %v719 = vsel %vm470, 1, 0
        %v720 = vsel %vm471, 1, 0
        %v721 = vsel %vm472, 1, 0
        %v722 = vsel %vm473, 1, 0
        %v723 = vsel %vm474, 1, 0
        %v724 = vsel %vm475, 1, 0
        %v725 = vsel %vm476, 1, 0
        %v726 = vsel %vm477, 1, 0
        %v727 = vsel %vm478, 1, 0
        %v728 = vsel %vm479, 1, 0
        %v729 = vsel %vm480, 1, 0
        %v730 = vsel %vm481, 1, 0
        %v731 = vsel %vm482, 1, 0
        %v732 = vsel %vm483, 1, 0
        %v733 = vsel %vm484, 1, 0
        %v734 = vsel %vm485, 1, 0
        %v735 = vsel %vm486, 1, 0
        %v736 = vsel %vm487, 1, 0
        %v737 = vsel %vm488, 1, 0
        %v738 = vsel %vm489, 1, 0
        %v739 = vsel %vm490, 1, 0
        %v740 = vsel %vm491, 1, 0
        %v741 = vsel %vm492, 1, 0
        %v742 = vsel %vm493, 1, 0
        %v743 = vsel %vm494, 1, 0
        %v744 = vsel %vm495, 1, 0
        %v745 = vsel %vm496, 1, 0
        %v746 = vsel %vm497, 1, 0
        %v747 = vsel %vm498, 1, 0
        %v748 = vsel %vm499, 1, 0
        %v749 = vsel %vm500, 1, 0
        %v750 = vsel %vm501, 1, 0
        %v751 = vsel %vm502, 1, 0
        %v752 = vsel %vm503, 1, 0
        %v753 = vsel %vm504, 1, 0
        %v754 = vsel %vm505, 1, 0
        %v755 = vsel %vm506, 1, 0
        %v756 = vsel %vm507, 1, 0
        %v757 = vsel %vm508, 1, 0
        %v758 = vsel %vm509, 1, 0
        %v759 = vsel %vm510, 1, 0
        %v760 = vsel %vm511, 1, 0
        %v761 = vsel %vm512, 1, 0
        %v762 = vsel %vm513, 1, 0
        %v763 = vsel %vm514, 1, 0
        %v764 = vsel %vm515, 1, 0
        %vm765 = vcmp.eq.s32.totalorder %v717, 1
        %vm766 = vcmp.eq.s32.totalorder %v718, 1
        %vm767 = vcmp.eq.s32.totalorder %v719, 1
        %vm768 = vcmp.eq.s32.totalorder %v720, 1
        %vm769 = vcmp.eq.s32.totalorder %v721, 1
        %vm770 = vcmp.eq.s32.totalorder %v722, 1
        %vm771 = vcmp.eq.s32.totalorder %v723, 1
        %vm772 = vcmp.eq.s32.totalorder %v724, 1
        %vm773 = vcmp.eq.s32.totalorder %v725, 1
        %vm774 = vcmp.eq.s32.totalorder %v726, 1
        %vm775 = vcmp.eq.s32.totalorder %v727, 1
        %vm776 = vcmp.eq.s32.totalorder %v728, 1
        %vm777 = vcmp.eq.s32.totalorder %v729, 1
        %vm778 = vcmp.eq.s32.totalorder %v730, 1
        %vm779 = vcmp.eq.s32.totalorder %v731, 1
        %vm780 = vcmp.eq.s32.totalorder %v732, 1
        %vm781 = vcmp.eq.s32.totalorder %v733, 1
        %vm782 = vcmp.eq.s32.totalorder %v734, 1
        %vm783 = vcmp.eq.s32.totalorder %v735, 1
        %vm784 = vcmp.eq.s32.totalorder %v736, 1
        %vm785 = vcmp.eq.s32.totalorder %v737, 1
        %vm786 = vcmp.eq.s32.totalorder %v738, 1
        %vm787 = vcmp.eq.s32.totalorder %v739, 1
        %vm788 = vcmp.eq.s32.totalorder %v740, 1
        %vm789 = vcmp.eq.s32.totalorder %v741, 1
        %vm790 = vcmp.eq.s32.totalorder %v742, 1
        %vm791 = vcmp.eq.s32.totalorder %v743, 1
        %vm792 = vcmp.eq.s32.totalorder %v744, 1
        %vm793 = vcmp.eq.s32.totalorder %v745, 1
        %vm794 = vcmp.eq.s32.totalorder %v746, 1
        %vm795 = vcmp.eq.s32.totalorder %v747, 1
        %vm796 = vcmp.eq.s32.totalorder %v748, 1
        %vm797 = vcmp.eq.s32.totalorder %v749, 1
        %vm798 = vcmp.eq.s32.totalorder %v750, 1
        %vm799 = vcmp.eq.s32.totalorder %v751, 1
        %vm800 = vcmp.eq.s32.totalorder %v752, 1
        %vm801 = vcmp.eq.s32.totalorder %v753, 1
        %vm802 = vcmp.eq.s32.totalorder %v754, 1
        %vm803 = vcmp.eq.s32.totalorder %v755, 1
        %vm804 = vcmp.eq.s32.totalorder %v756, 1
        %vm805 = vcmp.eq.s32.totalorder %v757, 1
        %vm806 = vcmp.eq.s32.totalorder %v758, 1
        %vm807 = vcmp.eq.s32.totalorder %v759, 1
        %vm808 = vcmp.eq.s32.totalorder %v760, 1
        %vm809 = vcmp.eq.s32.totalorder %v761, 1
        %vm810 = vcmp.eq.s32.totalorder %v762, 1
        %vm811 = vcmp.eq.s32.totalorder %v763, 1
        %vm812 = vcmp.eq.s32.totalorder %v764, 1
        %813 = vset.pattern.permute.xlu0 0
        %814 = vperm.xlu0 %813, %v178
        %v815 = vpop.permute.xlu0 %814
        %v817 = vsel %vm765, %v815, %v669
        %v818 = vsel %vm766, %v815, %v670
        %v819 = vsel %vm767, %v815, %v671
        %v820 = vsel %vm768, %v815, %v672
        %v821 = vsel %vm769, %v815, %v673
        %v822 = vsel %vm770, %v815, %v674
        %v823 = vsel %vm771, %v815, %v675
        %v824 = vsel %vm772, %v815, %v676
        %v825 = vsel %vm773, %v815, %v677
        %v826 = vsel %vm774, %v815, %v678
        %v827 = vsel %vm775, %v815, %v679
        %v828 = vsel %vm776, %v815, %v680
        %v829 = vsel %vm777, %v815, %v681
        %v830 = vsel %vm778, %v815, %v682
        %v831 = vsel %vm779, %v815, %v683
        %v832 = vsel %vm780, %v815, %v684
        %v833 = vsel %vm781, %v815, %v685
        %v834 = vsel %vm782, %v815, %v686
        %v835 = vsel %vm783, %v815, %v687
        %v836 = vsel %vm784, %v815, %v688
        %v837 = vsel %vm785, %v815, %v689
        %v838 = vsel %vm786, %v815, %v690
        %v839 = vsel %vm787, %v815, %v691
        %v840 = vsel %vm788, %v815, %v692
        %v841 = vsel %vm789, %v815, %v693
        %v842 = vsel %vm790, %v815, %v694
        %v843 = vsel %vm791, %v815, %v695
        %v844 = vsel %vm792, %v815, %v696
        %v845 = vsel %vm793, %v815, %v697
        %v846 = vsel %vm794, %v815, %v698
        %v847 = vsel %vm795, %v815, %v699
        %v848 = vsel %vm796, %v815, %v700
        %v849 = vsel %vm797, %v815, %v701
        %v850 = vsel %vm798, %v815, %v702
        %v851 = vsel %vm799, %v815, %v703
        %v852 = vsel %vm800, %v815, %v704
        %v853 = vsel %vm801, %v815, %v705
        %v854 = vsel %vm802, %v815, %v706
        %v855 = vsel %vm803, %v815, %v707
        %v856 = vsel %vm804, %v815, %v708
        %v857 = vsel %vm805, %v815, %v709
        %v858 = vsel %vm806, %v815, %v710
        %v859 = vsel %vm807, %v815, %v711
        %v860 = vsel %vm808, %v815, %v712
        %v861 = vsel %vm809, %v815, %v713
        %v862 = vsel %vm810, %v815, %v714
        %v863 = vsel %vm811, %v815, %v715
        %v864 = vsel %vm812, %v815, %v716
        %v865 = vld [vmem:[%s153] sm:$0xff]
        %v866 = vld [vmem:[%s153 + $0x8] sm:$0xff]
        %v867 = vld [vmem:[%s153 + $0x10] sm:$0xff]
        %v868 = vld [vmem:[%s153 + $0x18] sm:$0xff]
        %v869 = vld [vmem:[%s153 + $0x20] sm:$0xff]
        %v870 = vld [vmem:[%s153 + $0x28] sm:$0xff]
        %v877 = vlaneseq
        %v878 = vshrl.u32 %v877, 7
        %v879 = vsub.s32 0, %v878
        %v880 = vrot.slane %v865, %v879
        %v881 = vlaneseq
        %v882 = vshrl.u32 %v881, 7
        %v883 = vsub.s32 1, %v882
        %v884 = vrot.slane %v865, %v883
        %v885 = vlaneseq
        %v886 = vshrl.u32 %v885, 7
        %v887 = vsub.s32 2, %v886
        %v888 = vrot.slane %v865, %v887
        %v889 = vlaneseq
        %v890 = vshrl.u32 %v889, 7
        %v891 = vsub.s32 3, %v890
        %v892 = vrot.slane %v865, %v891
        %v893 = vlaneseq
        %v894 = vshrl.u32 %v893, 7
        %v895 = vsub.s32 4, %v894
        %v896 = vrot.slane %v865, %v895
        %v897 = vlaneseq
        %v898 = vshrl.u32 %v897, 7
        %v899 = vsub.s32 5, %v898
        %v900 = vrot.slane %v865, %v899
        %v901 = vlaneseq
        %v902 = vshrl.u32 %v901, 7
        %v903 = vsub.s32 6, %v902
        %v904 = vrot.slane %v865, %v903
        %v905 = vlaneseq
        %v906 = vshrl.u32 %v905, 7
        %v907 = vsub.s32 7, %v906
        %v908 = vrot.slane %v865, %v907
        %v909 = vlaneseq
        %v910 = vshrl.u32 %v909, 7
        %v911 = vsub.s32 0, %v910
        %v912 = vrot.slane %v866, %v911
        %v913 = vlaneseq
        %v914 = vshrl.u32 %v913, 7
        %v915 = vsub.s32 1, %v914
        %v916 = vrot.slane %v866, %v915
        %v917 = vlaneseq
        %v918 = vshrl.u32 %v917, 7
        %v919 = vsub.s32 2, %v918
        %v920 = vrot.slane %v866, %v919
        %v921 = vlaneseq
        %v922 = vshrl.u32 %v921, 7
        %v923 = vsub.s32 3, %v922
        %v924 = vrot.slane %v866, %v923
        %v925 = vlaneseq
        %v926 = vshrl.u32 %v925, 7
        %v927 = vsub.s32 4, %v926
        %v928 = vrot.slane %v866, %v927
        %v929 = vlaneseq
        %v930 = vshrl.u32 %v929, 7
        %v931 = vsub.s32 5, %v930
        %v932 = vrot.slane %v866, %v931
        %v933 = vlaneseq
        %v934 = vshrl.u32 %v933, 7
        %v935 = vsub.s32 6, %v934
        %v936 = vrot.slane %v866, %v935
        %v937 = vlaneseq
        %v938 = vshrl.u32 %v937, 7
        %v939 = vsub.s32 7, %v938
        %v940 = vrot.slane %v866, %v939
        %v941 = vlaneseq
        %v942 = vshrl.u32 %v941, 7
        %v943 = vsub.s32 0, %v942
        %v944 = vrot.slane %v867, %v943
        %v945 = vlaneseq
        %v946 = vshrl.u32 %v945, 7
        %v947 = vsub.s32 1, %v946
        %v948 = vrot.slane %v867, %v947
        %v949 = vlaneseq
        %v950 = vshrl.u32 %v949, 7
        %v951 = vsub.s32 2, %v950
        %v952 = vrot.slane %v867, %v951
        %v953 = vlaneseq
        %v954 = vshrl.u32 %v953, 7
        %v955 = vsub.s32 3, %v954
        %v956 = vrot.slane %v867, %v955
        %v957 = vlaneseq
        %v958 = vshrl.u32 %v957, 7
        %v959 = vsub.s32 4, %v958
        %v960 = vrot.slane %v867, %v959
        %v961 = vlaneseq
        %v962 = vshrl.u32 %v961, 7
        %v963 = vsub.s32 5, %v962
        %v964 = vrot.slane %v867, %v963
        %v965 = vlaneseq
        %v966 = vshrl.u32 %v965, 7
        %v967 = vsub.s32 6, %v966
        %v968 = vrot.slane %v867, %v967
        %v969 = vlaneseq
        %v970 = vshrl.u32 %v969, 7
        %v971 = vsub.s32 7, %v970
        %v972 = vrot.slane %v867, %v971
        %v973 = vlaneseq
        %v974 = vshrl.u32 %v973, 7
        %v975 = vsub.s32 0, %v974
        %v976 = vrot.slane %v868, %v975
        %v977 = vlaneseq
        %v978 = vshrl.u32 %v977, 7
        %v979 = vsub.s32 1, %v978
        %v980 = vrot.slane %v868, %v979
        %v981 = vlaneseq
        %v982 = vshrl.u32 %v981, 7
        %v983 = vsub.s32 2, %v982
        %v984 = vrot.slane %v868, %v983
        %v985 = vlaneseq
        %v986 = vshrl.u32 %v985, 7
        %v987 = vsub.s32 3, %v986
        %v988 = vrot.slane %v868, %v987
        %v989 = vlaneseq
        %v990 = vshrl.u32 %v989, 7
        %v991 = vsub.s32 4, %v990
        %v992 = vrot.slane %v868, %v991
        %v993 = vlaneseq
        %v994 = vshrl.u32 %v993, 7
        %v995 = vsub.s32 5, %v994
        %v996 = vrot.slane %v868, %v995
        %v997 = vlaneseq
        %v998 = vshrl.u32 %v997, 7
        %v999 = vsub.s32 6, %v998
        %v1000 = vrot.slane %v868, %v999
        %v1001 = vlaneseq
        %v1002 = vshrl.u32 %v1001, 7
        %v1003 = vsub.s32 7, %v1002
        %v1004 = vrot.slane %v868, %v1003
        %v1005 = vlaneseq
        %v1006 = vshrl.u32 %v1005, 7
        %v1007 = vsub.s32 0, %v1006
        %v1008 = vrot.slane %v869, %v1007
        %v1009 = vlaneseq
        %v1010 = vshrl.u32 %v1009, 7
        %v1011 = vsub.s32 1, %v1010
        %v1012 = vrot.slane %v869, %v1011
        %v1013 = vlaneseq
        %v1014 = vshrl.u32 %v1013, 7
        %v1015 = vsub.s32 2, %v1014
        %v1016 = vrot.slane %v869, %v1015
        %v1017 = vlaneseq
        %v1018 = vshrl.u32 %v1017, 7
        %v1019 = vsub.s32 3, %v1018
        %v1020 = vrot.slane %v869, %v1019
        %v1021 = vlaneseq
        %v1022 = vshrl.u32 %v1021, 7
        %v1023 = vsub.s32 4, %v1022
        %v1024 = vrot.slane %v869, %v1023
        %v1025 = vlaneseq
        %v1026 = vshrl.u32 %v1025, 7
        %v1027 = vsub.s32 5, %v1026
        %v1028 = vrot.slane %v869, %v1027
        %v1029 = vlaneseq
        %v1030 = vshrl.u32 %v1029, 7
        %v1031 = vsub.s32 6, %v1030
        %v1032 = vrot.slane %v869, %v1031
        %v1033 = vlaneseq
        %v1034 = vshrl.u32 %v1033, 7
        %v1035 = vsub.s32 7, %v1034
        %v1036 = vrot.slane %v869, %v1035
        %v1037 = vlaneseq
        %v1038 = vshrl.u32 %v1037, 7
        %v1039 = vsub.s32 0, %v1038
        %v1040 = vrot.slane %v870, %v1039
        %v1041 = vlaneseq
        %v1042 = vshrl.u32 %v1041, 7
        %v1043 = vsub.s32 1, %v1042
        %v1044 = vrot.slane %v870, %v1043
        %v1045 = vlaneseq
        %v1046 = vshrl.u32 %v1045, 7
        %v1047 = vsub.s32 2, %v1046
        %v1048 = vrot.slane %v870, %v1047
        %v1049 = vlaneseq
        %v1050 = vshrl.u32 %v1049, 7
        %v1051 = vsub.s32 3, %v1050
        %v1052 = vrot.slane %v870, %v1051
        %v1053 = vlaneseq
        %v1054 = vshrl.u32 %v1053, 7
        %v1055 = vsub.s32 4, %v1054
        %v1056 = vrot.slane %v870, %v1055
        %v1057 = vlaneseq
        %v1058 = vshrl.u32 %v1057, 7
        %v1059 = vsub.s32 5, %v1058
        %v1060 = vrot.slane %v870, %v1059
        %v1061 = vlaneseq
        %v1062 = vshrl.u32 %v1061, 7
        %v1063 = vsub.s32 6, %v1062
        %v1064 = vrot.slane %v870, %v1063
        %v1065 = vlaneseq
        %v1066 = vshrl.u32 %v1065, 7
        %v1067 = vsub.s32 7, %v1066
        %v1068 = vrot.slane %v870, %v1067
        %v1117 = vsub.f32 %v817, %v880
        %v1118 = vsub.f32 %v818, %v884
        %v1119 = vsub.f32 %v819, %v888
        %v1120 = vsub.f32 %v820, %v892
        %v1121 = vsub.f32 %v821, %v896
        %v1122 = vsub.f32 %v822, %v900
        %v1123 = vsub.f32 %v823, %v904
        %v1124 = vsub.f32 %v824, %v908
        %v1125 = vsub.f32 %v825, %v912
        %v1126 = vsub.f32 %v826, %v916
        %v1127 = vsub.f32 %v827, %v920
        %v1128 = vsub.f32 %v828, %v924
        %v1129 = vsub.f32 %v829, %v928
        %v1130 = vsub.f32 %v830, %v932
        %v1131 = vsub.f32 %v831, %v936
        %v1132 = vsub.f32 %v832, %v940
        %v1133 = vsub.f32 %v833, %v944
        %v1134 = vsub.f32 %v834, %v948
        %v1135 = vsub.f32 %v835, %v952
        %v1136 = vsub.f32 %v836, %v956
        %v1137 = vsub.f32 %v837, %v960
        %v1138 = vsub.f32 %v838, %v964
        %v1139 = vsub.f32 %v839, %v968
        %v1140 = vsub.f32 %v840, %v972
        %v1141 = vsub.f32 %v841, %v976
        %v1142 = vsub.f32 %v842, %v980
        %v1143 = vsub.f32 %v843, %v984
        %v1144 = vsub.f32 %v844, %v988
        %v1145 = vsub.f32 %v845, %v992
        %v1146 = vsub.f32 %v846, %v996
        %v1147 = vsub.f32 %v847, %v1000
        %v1148 = vsub.f32 %v848, %v1004
        %v1149 = vsub.f32 %v849, %v1008
        %v1150 = vsub.f32 %v850, %v1012
        %v1151 = vsub.f32 %v851, %v1016
        %v1152 = vsub.f32 %v852, %v1020
        %v1153 = vsub.f32 %v853, %v1024
        %v1154 = vsub.f32 %v854, %v1028
        %v1155 = vsub.f32 %v855, %v1032
        %v1156 = vsub.f32 %v856, %v1036
        %v1157 = vsub.f32 %v857, %v1040
        %v1158 = vsub.f32 %v858, %v1044
        %v1159 = vsub.f32 %v859, %v1048
        %v1160 = vsub.f32 %v860, %v1052
        %v1161 = vsub.f32 %v861, %v1056
        %v1162 = vsub.f32 %v862, %v1060
        %v1163 = vsub.f32 %v863, %v1064
        %v1164 = vsub.f32 %v864, %v1068
        %v1165 = vmax.f32 %v1117, -0.125
        %v1166 = vmax.f32 %v1118, -0.125
        %v1167 = vmax.f32 %v1119, -0.125
        %v1168 = vmax.f32 %v1120, -0.125
        %v1169 = vmax.f32 %v1121, -0.125
        %v1170 = vmax.f32 %v1122, -0.125
        %v1171 = vmax.f32 %v1123, -0.125
        %v1172 = vmax.f32 %v1124, -0.125
        %v1173 = vmax.f32 %v1125, -0.125
        %v1174 = vmax.f32 %v1126, -0.125
        %v1175 = vmax.f32 %v1127, -0.125
        %v1176 = vmax.f32 %v1128, -0.125
        %v1177 = vmax.f32 %v1129, -0.125
        %v1178 = vmax.f32 %v1130, -0.125
        %v1179 = vmax.f32 %v1131, -0.125
        %v1180 = vmax.f32 %v1132, -0.125
        %v1181 = vmax.f32 %v1133, -0.125
        %v1182 = vmax.f32 %v1134, -0.125
        %v1183 = vmax.f32 %v1135, -0.125
        %v1184 = vmax.f32 %v1136, -0.125
        %v1185 = vmax.f32 %v1137, -0.125
        %v1186 = vmax.f32 %v1138, -0.125
        %v1187 = vmax.f32 %v1139, -0.125
        %v1188 = vmax.f32 %v1140, -0.125
        %v1189 = vmax.f32 %v1141, -0.125
        %v1190 = vmax.f32 %v1142, -0.125
        %v1191 = vmax.f32 %v1143, -0.125
        %v1192 = vmax.f32 %v1144, -0.125
        %v1193 = vmax.f32 %v1145, -0.125
        %v1194 = vmax.f32 %v1146, -0.125
        %v1195 = vmax.f32 %v1147, -0.125
        %v1196 = vmax.f32 %v1148, -0.125
        %v1197 = vmax.f32 %v1149, -0.125
        %v1198 = vmax.f32 %v1150, -0.125
        %v1199 = vmax.f32 %v1151, -0.125
        %v1200 = vmax.f32 %v1152, -0.125
        %v1201 = vmax.f32 %v1153, -0.125
        %v1202 = vmax.f32 %v1154, -0.125
        %v1203 = vmax.f32 %v1155, -0.125
        %v1204 = vmax.f32 %v1156, -0.125
        %v1205 = vmax.f32 %v1157, -0.125
        %v1206 = vmax.f32 %v1158, -0.125
        %v1207 = vmax.f32 %v1159, -0.125
        %v1208 = vmax.f32 %v1160, -0.125
        %v1209 = vmax.f32 %v1161, -0.125
        %v1210 = vmax.f32 %v1162, -0.125
        %v1211 = vmax.f32 %v1163, -0.125
        %v1212 = vmax.f32 %v1164, -0.125
        %v1213 = vmin.f32 %v1165, 0.125
        %v1214 = vmin.f32 %v1166, 0.125
        %v1215 = vmin.f32 %v1167, 0.125
        %v1216 = vmin.f32 %v1168, 0.125
        %v1217 = vmin.f32 %v1169, 0.125
        %v1218 = vmin.f32 %v1170, 0.125
        %v1219 = vmin.f32 %v1171, 0.125
        %v1220 = vmin.f32 %v1172, 0.125
        %v1221 = vmin.f32 %v1173, 0.125
        %v1222 = vmin.f32 %v1174, 0.125
        %v1223 = vmin.f32 %v1175, 0.125
        %v1224 = vmin.f32 %v1176, 0.125
        %v1225 = vmin.f32 %v1177, 0.125
        %v1226 = vmin.f32 %v1178, 0.125
        %v1227 = vmin.f32 %v1179, 0.125
        %v1228 = vmin.f32 %v1180, 0.125
        %v1229 = vmin.f32 %v1181, 0.125
        %v1230 = vmin.f32 %v1182, 0.125
        %v1231 = vmin.f32 %v1183, 0.125
        %v1232 = vmin.f32 %v1184, 0.125
        %v1233 = vmin.f32 %v1185, 0.125
        %v1234 = vmin.f32 %v1186, 0.125
        %v1235 = vmin.f32 %v1187, 0.125
        %v1236 = vmin.f32 %v1188, 0.125
        %v1237 = vmin.f32 %v1189, 0.125
        %v1238 = vmin.f32 %v1190, 0.125
        %v1239 = vmin.f32 %v1191, 0.125
        %v1240 = vmin.f32 %v1192, 0.125
        %v1241 = vmin.f32 %v1193, 0.125
        %v1242 = vmin.f32 %v1194, 0.125
        %v1243 = vmin.f32 %v1195, 0.125
        %v1244 = vmin.f32 %v1196, 0.125
        %v1245 = vmin.f32 %v1197, 0.125
        %v1246 = vmin.f32 %v1198, 0.125
        %v1247 = vmin.f32 %v1199, 0.125
        %v1248 = vmin.f32 %v1200, 0.125
        %v1249 = vmin.f32 %v1201, 0.125
        %v1250 = vmin.f32 %v1202, 0.125
        %v1251 = vmin.f32 %v1203, 0.125
        %v1252 = vmin.f32 %v1204, 0.125
        %v1253 = vmin.f32 %v1205, 0.125
        %v1254 = vmin.f32 %v1206, 0.125
        %v1255 = vmin.f32 %v1207, 0.125
        %v1256 = vmin.f32 %v1208, 0.125
        %v1257 = vmin.f32 %v1209, 0.125
        %v1258 = vmin.f32 %v1210, 0.125
        %v1259 = vmin.f32 %v1211, 0.125
        %v1260 = vmin.f32 %v1212, 0.125
        %1261 = vst [vmem:[%s173] sm:$0xff] %v1213
        %1262 = vst [vmem:[%s173 + $0x8] sm:$0xff] %v1214
        %1263 = vst [vmem:[%s173 + $0x10] sm:$0xff] %v1215
        %1264 = vst [vmem:[%s173 + $0x18] sm:$0xff] %v1216
        %1265 = vst [vmem:[%s173 + $0x20] sm:$0xff] %v1217
        %1266 = vst [vmem:[%s173 + $0x28] sm:$0xff] %v1218
        %1267 = vst [vmem:[%s173 + $0x30] sm:$0xff] %v1219
        %1268 = vst [vmem:[%s173 + $0x38] sm:$0xff] %v1220
        %1269 = vst [vmem:[%s173 + $0x40] sm:$0xff] %v1221
        %1270 = vst [vmem:[%s173 + $0x48] sm:$0xff] %v1222
        %1271 = vst [vmem:[%s173 + $0x50] sm:$0xff] %v1223
        %1272 = vst [vmem:[%s173 + $0x58] sm:$0xff] %v1224
        %1273 = vst [vmem:[%s173 + $0x60] sm:$0xff] %v1225
        %1274 = vst [vmem:[%s173 + $0x68] sm:$0xff] %v1226
        %1275 = vst [vmem:[%s173 + $0x70] sm:$0xff] %v1227
        %1276 = vst [vmem:[%s173 + $0x78] sm:$0xff] %v1228
        %1277 = vst [vmem:[%s173 + $0x80] sm:$0xff] %v1229
        %1278 = vst [vmem:[%s173 + $0x88] sm:$0xff] %v1230
        %1279 = vst [vmem:[%s173 + $0x90] sm:$0xff] %v1231
        %1280 = vst [vmem:[%s173 + $0x98] sm:$0xff] %v1232
        %1281 = vst [vmem:[%s173 + $0xa0] sm:$0xff] %v1233
        %1282 = vst [vmem:[%s173 + $0xa8] sm:$0xff] %v1234
        %1283 = vst [vmem:[%s173 + $0xb0] sm:$0xff] %v1235
        %1284 = vst [vmem:[%s173 + $0xb8] sm:$0xff] %v1236
        %1285 = vst [vmem:[%s173 + $0xc0] sm:$0xff] %v1237
        %1286 = vst [vmem:[%s173 + $0xc8] sm:$0xff] %v1238
        %1287 = vst [vmem:[%s173 + $0xd0] sm:$0xff] %v1239
        %1288 = vst [vmem:[%s173 + $0xd8] sm:$0xff] %v1240
        %1289 = vst [vmem:[%s173 + $0xe0] sm:$0xff] %v1241
        %1290 = vst [vmem:[%s173 + $0xe8] sm:$0xff] %v1242
        %1291 = vst [vmem:[%s173 + $0xf0] sm:$0xff] %v1243
        %1292 = vst [vmem:[%s173 + $0xf8] sm:$0xff] %v1244
        %1293 = vst [vmem:[%s173 + $0x100] sm:$0xff] %v1245
        %1294 = vst [vmem:[%s173 + $0x108] sm:$0xff] %v1246
        %1295 = vst [vmem:[%s173 + $0x110] sm:$0xff] %v1247
        %1296 = vst [vmem:[%s173 + $0x118] sm:$0xff] %v1248
        %1297 = vst [vmem:[%s173 + $0x120] sm:$0xff] %v1249
        %1298 = vst [vmem:[%s173 + $0x128] sm:$0xff] %v1250
        %1299 = vst [vmem:[%s173 + $0x130] sm:$0xff] %v1251
        %1300 = vst [vmem:[%s173 + $0x138] sm:$0xff] %v1252
        %1301 = vst [vmem:[%s173 + $0x140] sm:$0xff] %v1253
        %1302 = vst [vmem:[%s173 + $0x148] sm:$0xff] %v1254
        %1303 = vst [vmem:[%s173 + $0x150] sm:$0xff] %v1255
        %1304 = vst [vmem:[%s173 + $0x158] sm:$0xff] %v1256
        %1305 = vst [vmem:[%s173 + $0x160] sm:$0xff] %v1257
        %1306 = vst [vmem:[%s173 + $0x168] sm:$0xff] %v1258
        %1307 = vst [vmem:[%s173 + $0x170] sm:$0xff] %v1259
        %1308 = vst [vmem:[%s173 + $0x178] sm:$0xff] %v1260
        %s1309 = sand.u32 %s88, 1
        %s1310 = scalar_lea.sflag [#allocation4], %s1309
        %s1311 = sand.u32 %s88, 1
        %s1312 = smul.addr %s1311, 384
        %s1313 = scalar_lea.vmem [#allocation5], %s1312
        // Predicated region
        $region33: #{tpu_custom_call.1} parent=27 // pred_check
          %p1314 = pneg %p98
        $region34: #{tpu_custom_call.1} parent=27 // pred_check_branch
          %1316 = sbr.rel (%p1314) target = $region36
        $region35: #{tpu_custom_call.1} parent=27 // pred_region
          %s1317 = smul.u32 48, %s23
          %s1319 = ssub.s32 6144, 6144
          %1320 = vsyncadd %s1310, %s1319
          %s1321 = smul.addr %s24, 96
          %s1322 = sadd.s32 %s1317, %s1321
          %s1323 = smul.addr %s1322, 128
          %s1324 = scalar_lea.hbm %s2, %s1323
          %s1326 = sshll.u32 %s1313, 4
          %s1327 = int_to_ptr.vmem [resolvable:$true] %s1326
          %1329 = dma.vmem_to_hbm [thread:$0]  %s1327, 6144, %s1324, %s1310
        $region36: #{tpu_custom_call.1} parent=27 // pred_fallthru
          _
      $region28: #{tpu_custom_call.1} parent=5 // pred_fallthru
        _
      %p1330 = scmp.le.s32.totalorder 2, %s14
      // Predicated region
      $region37: #{tpu_custom_call.1} parent=5 // pred_check
        %p1331 = pneg %p1330
      $region38: #{tpu_custom_call.1} parent=5 // pred_check_branch
        %1333 = sbr.rel (%p1331) target = $region40
      $region39: #{tpu_custom_call.1} parent=5 // pred_region
        %s1334 = ssub.s32 %s14, 2
        // Predicated region
        $region41: #{tpu_custom_call.1} parent=39 // pred_check
          %p1335 = pneg %p104
        $region42: #{tpu_custom_call.1} parent=39 // pred_check_branch
          %1337 = sbr.rel (%p1335) target = $region44
        $region43: #{tpu_custom_call.1} parent=39 // pred_region
          %s1338 = sand.u32 %s89, 1
          %s1339 = scalar_lea.sflag [#allocation4], %s1338
          %s1340 = sand.u32 %s89, 1
          %s1341 = smul.addr %s1340, 384
          %s1342 = scalar_lea.vmem [#allocation5], %s1341
          %1343 = dma.done %s1339, 6144
        $region44: #{tpu_custom_call.1} parent=39 // pred_fallthru
          _
      $region40: #{tpu_custom_call.1} parent=5 // pred_fallthru
        _
    $region6: #{tpu_custom_call.1} parent=1 // loop_footer
      %s18 = sadd.s32 1, %s14
    $region7: #{tpu_custom_call.1} parent=1 // loop_footer_branch
      %13 = sbr.rel target = $region3
    $region8: #{tpu_custom_call.1} parent=1 // loop_exit
      _
    %1344 = vsyncpa [#allocation3], 1
    %s1345 = scalar_lea.sflag [#allocation3], 1
    %1346 = vsyncpa %s1345, 1
    %1347 = vsyncpa [#allocation4], 1
    %s1348 = scalar_lea.sflag [#allocation4], 1
    %1349 = vsyncpa %s1348, 1

</llo_original>
